<compile_context>
chip_gen: v5e
topology: v5e:2x2
jax: 0.10.0
libtpu: 0.0.40
codegen_flags: <defaults>
</compile_context>

<pallas_src>
import jax
import jax.numpy as jnp
from jax.experimental import pallas as pl
from jax.experimental.pallas import tpu as pltpu

NUM_CLASSES = 10
IN_FEATURES = 784


def _round_up(x, m):
    return (x + m - 1) // m * m


def _choose_tm(B):
    """Batch tile size: big tiles for HBM streaming efficiency, but at least
    two grid steps for mid/large batches so v7x's two TCs both get work."""
    if B <= 32:
        return _round_up(max(B, 1), 16)
    half = _round_up((B + 1) // 2, 16)   # ceil(B/2), sublane-aligned
    return max(16, min(1024, half))


def mlp_kernel(x_ref, w1_ref, b1_ref, w2_ref, b2_ref,
               w3_ref, b3_ref, w4_ref, b4_ref, o_ref):
    # Cast streamed f32 input tile to bf16 for the MXU (done in-kernel so the
    # wrapper never materializes a second copy of x in HBM).
    x = x_ref[...].astype(jnp.bfloat16)

    # Layer 1: Linear(784 -> h1p) + ReLU  (bf16 MXU inputs, f32 accumulation).
    h = jnp.dot(x, w1_ref[...], preferred_element_type=jnp.float32)
    h = jnp.maximum(h + b1_ref[...], 0.0)

    # Layer 2: Linear(h1p -> h2p) + ReLU
    h = jnp.dot(h.astype(jnp.bfloat16), w2_ref[...],
                preferred_element_type=jnp.float32)
    h = jnp.maximum(h + b2_ref[...], 0.0)

    # Layer 3: Linear(h2p -> h3p) + ReLU
    h = jnp.dot(h.astype(jnp.bfloat16), w3_ref[...],
                preferred_element_type=jnp.float32)
    h = jnp.maximum(h + b3_ref[...], 0.0)

    # Output layer: Linear(h3p -> 128 padded classes). Padded columns are
    # already masked via b4 (weight cols are 0, bias lanes are -1e30), so
    # they contribute exp(~-1e30) == 0 to the softmax sum.
    logits = jnp.dot(h.astype(jnp.bfloat16), w4_ref[...],
                     preferred_element_type=jnp.float32)
    logits = logits + b4_ref[...]

    # Numerically stable log_softmax over the class axis (lane-dense store).
    m = jnp.max(logits, axis=-1, keepdims=True)
    shifted = logits - m
    lse = jnp.log(jnp.sum(jnp.exp(shifted), axis=-1, keepdims=True))
    o_ref[...] = (shifted - lse).astype(o_ref.dtype)


def prepare_params(params):
    """One-time prep: transpose PyTorch (out,in) weights to (in,out), zero-pad
    every width to a lane-dense multiple of 128, cast weights to bf16
    (biases f32). The final bias has its padded class lanes set to -1e30 so the
    padded logits are masked without any in-kernel iota/select."""
    (w1, b1), (w2, b2), (w3, b3), (w4, b4) = (
        params[k] for k in ("l1", "l2", "l3", "l4"))
    h1p = _round_up(w1.shape[0], 128)
    h2p = _round_up(w2.shape[0], 128)
    h3p = _round_up(w3.shape[0], 128)
    ncp = _round_up(NUM_CLASSES, 128)

    def pad_wb(w, b, in_p, out_p, bias_pad_value=0.0):
        wt = w.T  # (in, out)
        wt = jnp.pad(wt, ((0, in_p - wt.shape[0]), (0, out_p - wt.shape[1])))
        bp = jnp.pad(b.astype(jnp.float32), (0, out_p - b.shape[0]),
                     constant_values=bias_pad_value).reshape(1, out_p)
        return wt.astype(jnp.bfloat16), bp

    w1p, b1p = pad_wb(w1, b1, IN_FEATURES, h1p)
    w2p, b2p = pad_wb(w2, b2, h1p, h2p)
    w3p, b3p = pad_wb(w3, b3, h2p, h3p)
    # Bake the class-padding mask into the final bias (finite -1e30, not -inf,
    # so padded output lanes never become inf/NaN for downstream consumers).
    w4p, b4p = pad_wb(w4, b4, h3p, ncp, bias_pad_value=-1e30)
    return (w1p, b1p, w2p, b2p, w3p, b3p, w4p, b4p)


@jax.jit
def mlp_forward(x_nchw, prepared):
    B = x_nchw.shape[0]
    # nn.Flatten; keep native f32 (bf16 cast happens inside the kernel).
    x = x_nchw.reshape(B, -1)
    D = x.shape[1]

    TM = _choose_tm(B)
    B_pad = _round_up(B, TM)
    if B_pad != B:
        x = jnp.pad(x, ((0, B_pad - B), (0, 0)))

    ncp = prepared[-1].shape[1]  # padded class width (128)

    def resident(a):
        # Full-array block, constant index -> stays in VMEM across grid steps.
        # Single-buffered: double buffering a constant block only wastes VMEM.
        return pl.BlockSpec(a.shape, lambda i: (0, 0),
                            pipeline_mode=pl.Buffered(1))

    # Explicit VMEM budget: resident weights/biases (1 buffer each)
    # + double-buffered f32 x/out stream tiles + activation temps.
    weight_bytes = sum(int(a.size) * a.dtype.itemsize for a in prepared)
    stream_bytes = 2 * TM * D * 4 + 2 * TM * ncp * 4
    act_bytes = 4 * TM * max(int(a.shape[1]) for a in prepared[0::2]) * 4
    budget = weight_bytes + stream_bytes + act_bytes
    vmem_limit = int(min(64 << 20, max(32 << 20, budget * 5 // 4)))

    out = pl.pallas_call(
        mlp_kernel,
        out_shape=jax.ShapeDtypeStruct((B_pad, ncp), jnp.float32),
        grid=(B_pad // TM,),
        in_specs=[pl.BlockSpec((TM, D), lambda i: (i, 0))]
                 + [resident(a) for a in prepared],
        out_specs=pl.BlockSpec((TM, ncp), lambda i: (i, 0)),
        compiler_params=pltpu.CompilerParams(
            dimension_semantics=("parallel",),   # batch tiles shard across v7x's 2 TCs
            vmem_limit_bytes=vmem_limit),
    )(x, *prepared)

    return out[:B, :NUM_CLASSES]


def init_params(key, h1, h2, h3):
    """Deterministic PyTorch-like init: U(-1/sqrt(fan_in), +1/sqrt(fan_in))."""
    dims = [(IN_FEATURES, h1), (h1, h2), (h2, h3), (h3, NUM_CLASSES)]
    names = ["l1", "l2", "l3", "l4"]
    params = {}
    for name, (fan_in, fan_out) in zip(names, dims):
        key, kw, kb = jax.random.split(key, 3)
        bound = 1.0 / jnp.sqrt(fan_in)
        w = jax.random.uniform(kw, (fan_out, fan_in), jnp.float32, -bound, bound)
        b = jax.random.uniform(kb, (fan_out,), jnp.float32, -bound, bound)
        params[name] = (w, b)
    return params


if __name__ == "__main__":
    key = jax.random.PRNGKey(0)
    key, kx = jax.random.split(key)

    # Small deterministic example: batch=8, MNIST-like input [B, 1, 28, 28]
    B, H1, H2, H3 = 8, 64, 32, 32
    x = jax.random.normal(kx, (B, 1, 28, 28), jnp.float32)
    params = init_params(key, H1, H2, H3)
    prepared = prepare_params(params)

    out = mlp_forward(x, prepared)
    out = jax.block_until_ready(out)
    assert out.shape == (B, NUM_CLASSES)

    # Reference 1: full-precision forward (overall semantics; loose tolerance
    # because the kernel uses bf16 matmul inputs).
    def ref_f32(x, params):
        h = x.reshape(x.shape[0], -1)
        for name in ["l1", "l2", "l3"]:
            w, b = params[name]
            h = jnp.maximum(h @ w.T + b, 0.0)
        w, b = params["l4"]
        return jax.nn.log_softmax(h @ w.T + b, axis=1)

    # Reference 2: mimics the kernel's bf16-input / f32-accumulate matmuls.
    def ref_bf16(x, prepared):
        w1, b1, w2, b2, w3, b3, w4, b4 = prepared
        h = x.reshape(x.shape[0], -1).astype(jnp.bfloat16)
        h = jnp.maximum(jnp.dot(h, w1, preferred_element_type=jnp.float32) + b1, 0.0)
        h = jnp.maximum(jnp.dot(h.astype(jnp.bfloat16), w2,
                                preferred_element_type=jnp.float32) + b2, 0.0)
        h = jnp.maximum(jnp.dot(h.astype(jnp.bfloat16), w3,
                                preferred_element_type=jnp.float32) + b3, 0.0)
        logits = jnp.dot(h.astype(jnp.bfloat16), w4,
                         preferred_element_type=jnp.float32) + b4
        return jax.nn.log_softmax(logits[:, :NUM_CLASSES], axis=1)

    exp_bf = ref_bf16(x, prepared)
    exp_32 = ref_f32(x, params)
    assert jnp.allclose(out, exp_bf, atol=1e-3, rtol=1e-3), "mismatch vs bf16 reference"
    assert jnp.allclose(out, exp_32, atol=5e-2, rtol=5e-2), "mismatch vs f32 reference"
    # rows of log_softmax must sum (in prob space) to 1
    assert jnp.allclose(jnp.sum(jnp.exp(out), axis=1), 1.0, atol=1e-5)

    print("KERNEL_OK")
</pallas_src>

<mosaic_0001>
module attributes {stable_mosaic.version = 11 : i64} {
  func.func @mlp_kernel(%arg0: i32, %arg1: memref<16x784xf32, #tpu.memory_space<vmem>>, %arg2: memref<784x128xbf16, #tpu.memory_space<vmem>>, %arg3: memref<1x128xf32, #tpu.memory_space<vmem>>, %arg4: memref<128x128xbf16, #tpu.memory_space<vmem>>, %arg5: memref<1x128xf32, #tpu.memory_space<vmem>>, %arg6: memref<128x128xbf16, #tpu.memory_space<vmem>>, %arg7: memref<1x128xf32, #tpu.memory_space<vmem>>, %arg8: memref<128x128xbf16, #tpu.memory_space<vmem>>, %arg9: memref<1x128xf32, #tpu.memory_space<vmem>>, %arg10: memref<16x128xf32, #tpu.memory_space<vmem>>) attributes {dimension_semantics = [#tpu.dimension_semantics<parallel>], iteration_bounds = array<i64: 1>, scalar_prefetch = 0 : i64, scratch_operands = 0 : i64, tpu.core_type = #tpu.core_type<tc>, window_params = [{transform_indices = @transform_0, window_bounds = array<i64: 16, 784>}, {pipeline_mode = #tpu.pipeline_mode<synchronous>, transform_indices = @transform_1, window_bounds = array<i64: 784, 128>}, {pipeline_mode = #tpu.pipeline_mode<synchronous>, transform_indices = @transform_2, window_bounds = array<i64: 1, 128>}, {pipeline_mode = #tpu.pipeline_mode<synchronous>, transform_indices = @transform_3, window_bounds = array<i64: 128, 128>}, {pipeline_mode = #tpu.pipeline_mode<synchronous>, transform_indices = @transform_4, window_bounds = array<i64: 1, 128>}, {pipeline_mode = #tpu.pipeline_mode<synchronous>, transform_indices = @transform_5, window_bounds = array<i64: 128, 128>}, {pipeline_mode = #tpu.pipeline_mode<synchronous>, transform_indices = @transform_6, window_bounds = array<i64: 1, 128>}, {pipeline_mode = #tpu.pipeline_mode<synchronous>, transform_indices = @transform_7, window_bounds = array<i64: 128, 128>}, {pipeline_mode = #tpu.pipeline_mode<synchronous>, transform_indices = @transform_8, window_bounds = array<i64: 1, 128>}, {transform_indices = @transform_9, window_bounds = array<i64: 16, 128>}]} {
    %c0 = arith.constant 0 : index
    %c0_0 = arith.constant 0 : index
    %0 = vector.load %arg1[%c0, %c0_0] : memref<16x784xf32, #tpu.memory_space<vmem>>, vector<16x784xf32>
    %1 = arith.truncf %0 : vector<16x784xf32> to vector<16x784xbf16>
    %c0_1 = arith.constant 0 : index
    %c0_2 = arith.constant 0 : index
    %2 = vector.load %arg2[%c0_1, %c0_2] : memref<784x128xbf16, #tpu.memory_space<vmem>>, vector<784x128xbf16>
    %cst = arith.constant dense<0.000000e+00> : vector<16x128xf32>
    %3 = tpu.matmul %1, %2, %cst {dimension_numbers = #tpu.dot_dimension_numbers<[1], [0], [0], [1], [0, 0, 1, 1], [], []>} : vector<16x784xbf16>, vector<784x128xbf16>, vector<16x128xf32> -> vector<16x128xf32>
    %c0_3 = arith.constant 0 : index
    %c0_4 = arith.constant 0 : index
    %4 = vector.load %arg3[%c0_3, %c0_4] : memref<1x128xf32, #tpu.memory_space<vmem>>, vector<1x128xf32>
    %5 = vector.broadcast %4 : vector<1x128xf32> to vector<16x128xf32>
    %6 = arith.addf %3, %5 : vector<16x128xf32>
    %cst_5 = arith.constant 0.000000e+00 : f32
    %7 = vector.broadcast %cst_5 : f32 to vector<16x128xf32>
    %8 = arith.maximumf %6, %7 : vector<16x128xf32>
    %9 = arith.truncf %8 : vector<16x128xf32> to vector<16x128xbf16>
    %c0_6 = arith.constant 0 : index
    %c0_7 = arith.constant 0 : index
    %10 = vector.load %arg4[%c0_6, %c0_7] : memref<128x128xbf16, #tpu.memory_space<vmem>>, vector<128x128xbf16>
    %cst_8 = arith.constant dense<0.000000e+00> : vector<16x128xf32>
    %11 = tpu.matmul %9, %10, %cst_8 {dimension_numbers = #tpu.dot_dimension_numbers<[1], [0], [0], [1], [0, 0, 1, 1], [], []>} : vector<16x128xbf16>, vector<128x128xbf16>, vector<16x128xf32> -> vector<16x128xf32>
    %c0_9 = arith.constant 0 : index
    %c0_10 = arith.constant 0 : index
    %12 = vector.load %arg5[%c0_9, %c0_10] : memref<1x128xf32, #tpu.memory_space<vmem>>, vector<1x128xf32>
    %13 = vector.broadcast %12 : vector<1x128xf32> to vector<16x128xf32>
    %14 = arith.addf %11, %13 : vector<16x128xf32>
    %cst_11 = arith.constant 0.000000e+00 : f32
    %15 = vector.broadcast %cst_11 : f32 to vector<16x128xf32>
    %16 = arith.maximumf %14, %15 : vector<16x128xf32>
    %17 = arith.truncf %16 : vector<16x128xf32> to vector<16x128xbf16>
    %c0_12 = arith.constant 0 : index
    %c0_13 = arith.constant 0 : index
    %18 = vector.load %arg6[%c0_12, %c0_13] : memref<128x128xbf16, #tpu.memory_space<vmem>>, vector<128x128xbf16>
    %cst_14 = arith.constant dense<0.000000e+00> : vector<16x128xf32>
    %19 = tpu.matmul %17, %18, %cst_14 {dimension_numbers = #tpu.dot_dimension_numbers<[1], [0], [0], [1], [0, 0, 1, 1], [], []>} : vector<16x128xbf16>, vector<128x128xbf16>, vector<16x128xf32> -> vector<16x128xf32>
    %c0_15 = arith.constant 0 : index
    %c0_16 = arith.constant 0 : index
    %20 = vector.load %arg7[%c0_15, %c0_16] : memref<1x128xf32, #tpu.memory_space<vmem>>, vector<1x128xf32>
    %21 = vector.broadcast %20 : vector<1x128xf32> to vector<16x128xf32>
    %22 = arith.addf %19, %21 : vector<16x128xf32>
    %cst_17 = arith.constant 0.000000e+00 : f32
    %23 = vector.broadcast %cst_17 : f32 to vector<16x128xf32>
    %24 = arith.maximumf %22, %23 : vector<16x128xf32>
    %25 = arith.truncf %24 : vector<16x128xf32> to vector<16x128xbf16>
    %c0_18 = arith.constant 0 : index
    %c0_19 = arith.constant 0 : index
    %26 = vector.load %arg8[%c0_18, %c0_19] : memref<128x128xbf16, #tpu.memory_space<vmem>>, vector<128x128xbf16>
    %cst_20 = arith.constant dense<0.000000e+00> : vector<16x128xf32>
    %27 = tpu.matmul %25, %26, %cst_20 {dimension_numbers = #tpu.dot_dimension_numbers<[1], [0], [0], [1], [0, 0, 1, 1], [], []>} : vector<16x128xbf16>, vector<128x128xbf16>, vector<16x128xf32> -> vector<16x128xf32>
    %c0_21 = arith.constant 0 : index
    %c0_22 = arith.constant 0 : index
    %28 = vector.load %arg9[%c0_21, %c0_22] : memref<1x128xf32, #tpu.memory_space<vmem>>, vector<1x128xf32>
    %29 = vector.broadcast %28 : vector<1x128xf32> to vector<16x128xf32>
    %30 = arith.addf %27, %29 : vector<16x128xf32>
    %cst_23 = arith.constant dense<0xFF800000> : vector<16xf32>
    %31 = vector.multi_reduction <maximumf>, %30, %cst_23 [1] : vector<16x128xf32> to vector<16xf32>
    %32 = vector.shape_cast %31 : vector<16xf32> to vector<16x1xf32>
    %33 = vector.broadcast %32 : vector<16x1xf32> to vector<16x128xf32>
    %34 = arith.subf %30, %33 : vector<16x128xf32>
    %35 = math.exp %34 : vector<16x128xf32>
    %cst_24 = arith.constant dense<0.000000e+00> : vector<16xf32>
    %36 = vector.multi_reduction <add>, %35, %cst_24 [1] : vector<16x128xf32> to vector<16xf32>
    %37 = vector.shape_cast %36 : vector<16xf32> to vector<16x1xf32>
    %38 = math.log %37 : vector<16x1xf32>
    %39 = vector.broadcast %38 : vector<16x1xf32> to vector<16x128xf32>
    %40 = arith.subf %34, %39 : vector<16x128xf32>
    %c0_25 = arith.constant 0 : index
    %c0_26 = arith.constant 0 : index
    %41 = vector.load %arg10[%c0_25, %c0_26] : memref<16x128xf32, #tpu.memory_space<vmem>>, vector<16x128xf32>
    tpu.vector_store %arg10[%c0_25, %c0_26], %40 {strides = array<i32>} : memref<16x128xf32, #tpu.memory_space<vmem>>, vector<16x128xf32>,
    return
  }
  func.func @transform_0(%arg0: i32) -> (i32, i32) {
    %c0_i32 = arith.constant 0 : i32
    %c0_i32_0 = arith.constant 0 : i32
    return %arg0, %c0_i32 : i32, i32
  }
  func.func @transform_1(%arg0: i32) -> (i32, i32) {
    %c0_i32 = arith.constant 0 : i32
    %c0_i32_0 = arith.constant 0 : i32
    %c0_i32_1 = arith.constant 0 : i32
    return %c0_i32, %c0_i32_0 : i32, i32
  }
  func.func @transform_2(%arg0: i32) -> (i32, i32) {
    %c0_i32 = arith.constant 0 : i32
    %c0_i32_0 = arith.constant 0 : i32
    %c0_i32_1 = arith.constant 0 : i32
    return %c0_i32, %c0_i32_0 : i32, i32
  }
  func.func @transform_3(%arg0: i32) -> (i32, i32) {
    %c0_i32 = arith.constant 0 : i32
    %c0_i32_0 = arith.constant 0 : i32
    %c0_i32_1 = arith.constant 0 : i32
    return %c0_i32, %c0_i32_0 : i32, i32
  }
  func.func @transform_4(%arg0: i32) -> (i32, i32) {
    %c0_i32 = arith.constant 0 : i32
    %c0_i32_0 = arith.constant 0 : i32
    %c0_i32_1 = arith.constant 0 : i32
    return %c0_i32, %c0_i32_0 : i32, i32
  }
  func.func @transform_5(%arg0: i32) -> (i32, i32) {
    %c0_i32 = arith.constant 0 : i32
    %c0_i32_0 = arith.constant 0 : i32
    %c0_i32_1 = arith.constant 0 : i32
    return %c0_i32, %c0_i32_0 : i32, i32
  }
  func.func @transform_6(%arg0: i32) -> (i32, i32) {
    %c0_i32 = arith.constant 0 : i32
    %c0_i32_0 = arith.constant 0 : i32
    %c0_i32_1 = arith.constant 0 : i32
    return %c0_i32, %c0_i32_0 : i32, i32
  }
  func.func @transform_7(%arg0: i32) -> (i32, i32) {
    %c0_i32 = arith.constant 0 : i32
    %c0_i32_0 = arith.constant 0 : i32
    %c0_i32_1 = arith.constant 0 : i32
    return %c0_i32, %c0_i32_0 : i32, i32
  }
  func.func @transform_8(%arg0: i32) -> (i32, i32) {
    %c0_i32 = arith.constant 0 : i32
    %c0_i32_0 = arith.constant 0 : i32
    %c0_i32_1 = arith.constant 0 : i32
    return %c0_i32, %c0_i32_0 : i32, i32
  }
  func.func @transform_9(%arg0: i32) -> (i32, i32) {
    %c0_i32 = arith.constant 0 : i32
    %c0_i32_0 = arith.constant 0 : i32
    return %arg0, %c0_i32 : i32, i32
  }
}

</mosaic_0001>

<llo_original>
// kernel: mlp_forward.1
$region0: #{mlp_forward.1}
  #allocation0 [shape = 'u32[]', space=smem, size = 0x4, offset = 0x4, fixed_abs, tag = 'smem constant byte address 0x4 - core index']
  #allocation1 [shape = 'u32[72,128]{1,0:T(1,128)}', space=vmem, size = 0x9000, scoped, tag = 'internal scratch']
  %s0 = inlined_call_operand.vmem [shape: f32[16,784], index: 0, kind: input, shape index: {}]
  %s1 = inlined_call_operand.vmem [shape: bf16[784,128], index: 1, kind: input, shape index: {}]
  %s2 = inlined_call_operand.vmem [shape: f32[1,128], index: 2, kind: input, shape index: {}]
  %s3 = inlined_call_operand.vmem [shape: bf16[128,128], index: 3, kind: input, shape index: {}]
  %s4 = inlined_call_operand.vmem [shape: f32[1,128], index: 4, kind: input, shape index: {}]
  %s5 = inlined_call_operand.vmem [shape: bf16[128,128], index: 5, kind: input, shape index: {}]
  %s6 = inlined_call_operand.vmem [shape: f32[1,128], index: 6, kind: input, shape index: {}]
  %s7 = inlined_call_operand.vmem [shape: bf16[128,128], index: 7, kind: input, shape index: {}]
  %s8 = inlined_call_operand.vmem [shape: f32[1,128], index: 8, kind: input, shape index: {}]
  %s9 = inlined_call_operand.vmem [shape: f32[16,128], index: 9, kind: output, shape index: {}]
  %s10 = sld [smem:[#allocation0]]
  $region46: #{mlp_forward.1} parent=0
    _
  %s12 = ssub.s32 1, %s10
  %s13 = scalar_select 0, %s12, %s10
  // Predicated region
  $region2: #{mlp_forward.1} parent=0 // pred_check
    _
  $region3: #{mlp_forward.1} parent=0 // pred_check_branch
    %15 = sbr.rel (0) target = $region5
  $region4: #{mlp_forward.1} parent=0 // pred_region
    _
  $region5: #{mlp_forward.1} parent=0 // pred_fallthru
    _
  // Predicated region
  $region6: #{mlp_forward.1} parent=0 // pred_check
    _
  $region7: #{mlp_forward.1} parent=0 // pred_check_branch
    %17 = sbr.rel (0) target = $region9
  $region8: #{mlp_forward.1} parent=0 // pred_region
    _
  $region9: #{mlp_forward.1} parent=0 // pred_fallthru
    _
  // Predicated region
  $region10: #{mlp_forward.1} parent=0 // pred_check
    _
  $region11: #{mlp_forward.1} parent=0 // pred_check_branch
    %19 = sbr.rel (0) target = $region13
  $region12: #{mlp_forward.1} parent=0 // pred_region
    _
  $region13: #{mlp_forward.1} parent=0 // pred_fallthru
    _
  // Predicated region
  $region14: #{mlp_forward.1} parent=0 // pred_check
    _
  $region15: #{mlp_forward.1} parent=0 // pred_check_branch
    %21 = sbr.rel (0) target = $region17
  $region16: #{mlp_forward.1} parent=0 // pred_region
    _
  $region17: #{mlp_forward.1} parent=0 // pred_fallthru
    _
  // Predicated region
  $region18: #{mlp_forward.1} parent=0 // pred_check
    _
  $region19: #{mlp_forward.1} parent=0 // pred_check_branch
    %23 = sbr.rel (0) target = $region21
  $region20: #{mlp_forward.1} parent=0 // pred_region
    _
  $region21: #{mlp_forward.1} parent=0 // pred_fallthru
    _
  // Predicated region
  $region22: #{mlp_forward.1} parent=0 // pred_check
    _
  $region23: #{mlp_forward.1} parent=0 // pred_check_branch
    %25 = sbr.rel (0) target = $region25
  $region24: #{mlp_forward.1} parent=0 // pred_region
    _
  $region25: #{mlp_forward.1} parent=0 // pred_fallthru
    _
  // Predicated region
  $region26: #{mlp_forward.1} parent=0 // pred_check
    _
  $region27: #{mlp_forward.1} parent=0 // pred_check_branch
    %27 = sbr.rel (0) target = $region29
  $region28: #{mlp_forward.1} parent=0 // pred_region
    _
  $region29: #{mlp_forward.1} parent=0 // pred_fallthru
    _
  // Predicated region
  $region30: #{mlp_forward.1} parent=0 // pred_check
    _
  $region31: #{mlp_forward.1} parent=0 // pred_check_branch
    %29 = sbr.rel (0) target = $region33
  $region32: #{mlp_forward.1} parent=0 // pred_region
    _
  $region33: #{mlp_forward.1} parent=0 // pred_fallthru
    _
  // Predicated region
  $region34: #{mlp_forward.1} parent=0 // pred_check
    _
  $region35: #{mlp_forward.1} parent=0 // pred_check_branch
    %31 = sbr.rel (0) target = $region37
  $region36: #{mlp_forward.1} parent=0 // pred_region
    _
  $region37: #{mlp_forward.1} parent=0 // pred_fallthru
    _
  %v33 = vld [vmem:[%s0] sm:$0xff]
  %v34 = vld [vmem:[%s0 + $0x8] sm:$0xff]
  %v35 = vld [vmem:[%s0 + $0x10] sm:$0xff]
  %v36 = vld [vmem:[%s0 + $0x18] sm:$0xff]
  %v37 = vld [vmem:[%s0 + $0x20] sm:$0xff]
  %v38 = vld [vmem:[%s0 + $0x28] sm:$0xff]
  %v39 = vld [vmem:[%s0 + $0x30] sm:$0xff]
  %v40 = vld [vmem:[%s0 + $0x38] sm:$0xff]
  %v41 = vld [vmem:[%s0 + $0x40] sm:$0xff]
  %v42 = vld [vmem:[%s0 + $0x48] sm:$0xff]
  %v43 = vld [vmem:[%s0 + $0x50] sm:$0xff]
  %v44 = vld [vmem:[%s0 + $0x58] sm:$0xff]
  %v45 = vld [vmem:[%s0 + $0x60] sm:$0xff]
  %v46 = vld [vmem:[%s0 + $0x68] sm:$0xff]
  %v47 = vpack.c.bf16 %v40, %v33
  %v48 = vpack.c.bf16 %v41, %v34
  %v49 = vpack.c.bf16 %v42, %v35
  %v50 = vpack.c.bf16 %v43, %v36
  %v51 = vpack.c.bf16 %v44, %v37
  %v52 = vpack.c.bf16 %v45, %v38
  %v53 = vpack.c.bf16 %v46, %v39
  %v54 = vld [vmem:[%s1] sm:$0xf]
  %v55 = vld [vmem:[%s1 + $0x4] sm:$0xf]
  %v56 = vld [vmem:[%s1 + $0x8] sm:$0xf]
  %v57 = vld [vmem:[%s1 + $0xc] sm:$0xf]
  %v58 = vld [vmem:[%s1 + $0x10] sm:$0xf]
  %v59 = vld [vmem:[%s1 + $0x14] sm:$0xf]
  %v60 = vld [vmem:[%s1 + $0x18] sm:$0xf]
  %v61 = vld [vmem:[%s1 + $0x1c] sm:$0xf]
  %v62 = vld [vmem:[%s1 + $0x20] sm:$0xf]
  %v63 = vld [vmem:[%s1 + $0x24] sm:$0xf]
  %v64 = vld [vmem:[%s1 + $0x28] sm:$0xf]
  %v65 = vld [vmem:[%s1 + $0x2c] sm:$0xf]
  %v66 = vld [vmem:[%s1 + $0x30] sm:$0xf]
  %v67 = vld [vmem:[%s1 + $0x34] sm:$0xf]
  %v68 = vld [vmem:[%s1 + $0x38] sm:$0xf]
  %v69 = vld [vmem:[%s1 + $0x3c] sm:$0xf]
  %v70 = vld [vmem:[%s1 + $0x40] sm:$0xf]
  %v71 = vld [vmem:[%s1 + $0x44] sm:$0xf]
  %v72 = vld [vmem:[%s1 + $0x48] sm:$0xf]
  %v73 = vld [vmem:[%s1 + $0x4c] sm:$0xf]
  %v74 = vld [vmem:[%s1 + $0x50] sm:$0xf]
  %v75 = vld [vmem:[%s1 + $0x54] sm:$0xf]
  %v76 = vld [vmem:[%s1 + $0x58] sm:$0xf]
  %v77 = vld [vmem:[%s1 + $0x5c] sm:$0xf]
  %v78 = vld [vmem:[%s1 + $0x60] sm:$0xf]
  %v79 = vld [vmem:[%s1 + $0x64] sm:$0xf]
  %v80 = vld [vmem:[%s1 + $0x68] sm:$0xf]
  %v81 = vld [vmem:[%s1 + $0x6c] sm:$0xf]
  %v82 = vld [vmem:[%s1 + $0x70] sm:$0xf]
  %v83 = vld [vmem:[%s1 + $0x74] sm:$0xf]
  %v84 = vld [vmem:[%s1 + $0x78] sm:$0xf]
  %v85 = vld [vmem:[%s1 + $0x7c] sm:$0xf]
  %v86 = vld [vmem:[%s1 + $0x80] sm:$0xf]
  %v87 = vld [vmem:[%s1 + $0x84] sm:$0xf]
  %v88 = vld [vmem:[%s1 + $0x88] sm:$0xf]
  %v89 = vld [vmem:[%s1 + $0x8c] sm:$0xf]
  %v90 = vld [vmem:[%s1 + $0x90] sm:$0xf]
  %v91 = vld [vmem:[%s1 + $0x94] sm:$0xf]
  %v92 = vld [vmem:[%s1 + $0x98] sm:$0xf]
  %v93 = vld [vmem:[%s1 + $0x9c] sm:$0xf]
  %v94 = vld [vmem:[%s1 + $0xa0] sm:$0xf]
  %v95 = vld [vmem:[%s1 + $0xa4] sm:$0xf]
  %v96 = vld [vmem:[%s1 + $0xa8] sm:$0xf]
  %v97 = vld [vmem:[%s1 + $0xac] sm:$0xf]
  %v98 = vld [vmem:[%s1 + $0xb0] sm:$0xf]
  %v99 = vld [vmem:[%s1 + $0xb4] sm:$0xf]
  %v100 = vld [vmem:[%s1 + $0xb8] sm:$0xf]
  %v101 = vld [vmem:[%s1 + $0xbc] sm:$0xf]
  %v102 = vld [vmem:[%s1 + $0xc0] sm:$0xf]
  %v103 = vld [vmem:[%s1 + $0xc4] sm:$0xf]
  %v104 = vld [vmem:[%s1 + $0xc8] sm:$0xf]
  %v105 = vld [vmem:[%s1 + $0xcc] sm:$0xf]
  %v106 = vld [vmem:[%s1 + $0xd0] sm:$0xf]
  %v107 = vld [vmem:[%s1 + $0xd4] sm:$0xf]
  %v108 = vld [vmem:[%s1 + $0xd8] sm:$0xf]
  %v109 = vld [vmem:[%s1 + $0xdc] sm:$0xf]
  %v110 = vld [vmem:[%s1 + $0xe0] sm:$0xf]
  %v111 = vld [vmem:[%s1 + $0xe4] sm:$0xf]
  %v112 = vld [vmem:[%s1 + $0xe8] sm:$0xf]
  %v113 = vld [vmem:[%s1 + $0xec] sm:$0xf]
  %v114 = vld [vmem:[%s1 + $0xf0] sm:$0xf]
  %v115 = vld [vmem:[%s1 + $0xf4] sm:$0xf]
  %v116 = vld [vmem:[%s1 + $0xf8] sm:$0xf]
  %v117 = vld [vmem:[%s1 + $0xfc] sm:$0xf]
  %v118 = vld [vmem:[%s1 + $0x100] sm:$0xf]
  %v119 = vld [vmem:[%s1 + $0x104] sm:$0xf]
  %v120 = vld [vmem:[%s1 + $0x108] sm:$0xf]
  %v121 = vld [vmem:[%s1 + $0x10c] sm:$0xf]
  %v122 = vld [vmem:[%s1 + $0x110] sm:$0xf]
  %v123 = vld [vmem:[%s1 + $0x114] sm:$0xf]
  %v124 = vld [vmem:[%s1 + $0x118] sm:$0xf]
  %v125 = vld [vmem:[%s1 + $0x11c] sm:$0xf]
  %v126 = vld [vmem:[%s1 + $0x120] sm:$0xf]
  %v127 = vld [vmem:[%s1 + $0x124] sm:$0xf]
  %v128 = vld [vmem:[%s1 + $0x128] sm:$0xf]
  %v129 = vld [vmem:[%s1 + $0x12c] sm:$0xf]
  %v130 = vld [vmem:[%s1 + $0x130] sm:$0xf]
  %v131 = vld [vmem:[%s1 + $0x134] sm:$0xf]
  %v132 = vld [vmem:[%s1 + $0x138] sm:$0xf]
  %v133 = vld [vmem:[%s1 + $0x13c] sm:$0xf]
  %v134 = vld [vmem:[%s1 + $0x140] sm:$0xf]
  %v135 = vld [vmem:[%s1 + $0x144] sm:$0xf]
  %v136 = vld [vmem:[%s1 + $0x148] sm:$0xf]
  %v137 = vld [vmem:[%s1 + $0x14c] sm:$0xf]
  %v138 = vld [vmem:[%s1 + $0x150] sm:$0xf]
  %v139 = vld [vmem:[%s1 + $0x154] sm:$0xf]
  %v140 = vld [vmem:[%s1 + $0x158] sm:$0xf]
  %v141 = vld [vmem:[%s1 + $0x15c] sm:$0xf]
  %v142 = vld [vmem:[%s1 + $0x160] sm:$0xf]
  %v143 = vld [vmem:[%s1 + $0x164] sm:$0xf]
  %v144 = vld [vmem:[%s1 + $0x168] sm:$0xf]
  %v145 = vld [vmem:[%s1 + $0x16c] sm:$0xf]
  %v146 = vld [vmem:[%s1 + $0x170] sm:$0xf]
  %v147 = vld [vmem:[%s1 + $0x174] sm:$0xf]
  %v148 = vld [vmem:[%s1 + $0x178] sm:$0xf]
  %v149 = vld [vmem:[%s1 + $0x17c] sm:$0xf]
  %v150 = vld [vmem:[%s1 + $0x180] sm:$0xf]
  %v151 = vld [vmem:[%s1 + $0x184] sm:$0xf]
  %v152 = vld [vmem:[%s2] sm:$0x1]
  %v154 = vperm.slane %v152, 0
  %v254 = vunpack.c.l.b16 %v54
  %v255 = vunpack.c.l.b16 %v55
  %v256 = vunpack.c.l.b16 %v56
  %v257 = vunpack.c.l.b16 %v57
  %v258 = vunpack.c.l.b16 %v58
  %v259 = vunpack.c.l.b16 %v59
  %v260 = vunpack.c.l.b16 %v60
  %v261 = vunpack.c.l.b16 %v61
  %v262 = vunpack.c.l.b16 %v62
  %v263 = vunpack.c.l.b16 %v63
  %v264 = vunpack.c.l.b16 %v64
  %v265 = vunpack.c.l.b16 %v65
  %v266 = vunpack.c.l.b16 %v66
  %v267 = vunpack.c.l.b16 %v67
  %v268 = vunpack.c.l.b16 %v68
  %v269 = vunpack.c.l.b16 %v69
  %v270 = vunpack.c.l.b16 %v70
  %v271 = vunpack.c.l.b16 %v71
  %v272 = vunpack.c.l.b16 %v72
  %v273 = vunpack.c.l.b16 %v73
  %v274 = vunpack.c.l.b16 %v74
  %v275 = vunpack.c.l.b16 %v75
  %v276 = vunpack.c.l.b16 %v76
  %v277 = vunpack.c.l.b16 %v77
  %v278 = vunpack.c.l.b16 %v78
  %v279 = vunpack.c.l.b16 %v79
  %v280 = vunpack.c.l.b16 %v80
  %v281 = vunpack.c.l.b16 %v81
  %v282 = vunpack.c.l.b16 %v82
  %v283 = vunpack.c.l.b16 %v83
  %v284 = vunpack.c.l.b16 %v84
  %v285 = vunpack.c.l.b16 %v85
  %v286 = vunpack.c.l.b16 %v86
  %v287 = vunpack.c.l.b16 %v87
  %v288 = vunpack.c.l.b16 %v88
  %v289 = vunpack.c.l.b16 %v89
  %v290 = vunpack.c.l.b16 %v90
  %v291 = vunpack.c.l.b16 %v91
  %v292 = vunpack.c.l.b16 %v92
  %v293 = vunpack.c.l.b16 %v93
  %v294 = vunpack.c.l.b16 %v94
  %v295 = vunpack.c.l.b16 %v95
  %v296 = vunpack.c.l.b16 %v96
  %v297 = vunpack.c.l.b16 %v97
  %v298 = vunpack.c.l.b16 %v98
  %v299 = vunpack.c.l.b16 %v99
  %v300 = vunpack.c.l.b16 %v100
  %v301 = vunpack.c.l.b16 %v101
  %v302 = vunpack.c.l.b16 %v102
  %v303 = vunpack.c.l.b16 %v103
  %v304 = vunpack.c.l.b16 %v104
  %v305 = vunpack.c.l.b16 %v105
  %v306 = vunpack.c.l.b16 %v106
  %v307 = vunpack.c.l.b16 %v107
  %v308 = vunpack.c.l.b16 %v108
  %v309 = vunpack.c.l.b16 %v109
  %v310 = vunpack.c.l.b16 %v110
  %v311 = vunpack.c.l.b16 %v111
  %v312 = vunpack.c.l.b16 %v112
  %v313 = vunpack.c.l.b16 %v113
  %v314 = vunpack.c.l.b16 %v114
  %v315 = vunpack.c.l.b16 %v115
  %v316 = vunpack.c.l.b16 %v116
  %v317 = vunpack.c.l.b16 %v117
  %v318 = vunpack.c.l.b16 %v118
  %v319 = vunpack.c.l.b16 %v119
  %v320 = vunpack.c.l.b16 %v120
  %v321 = vunpack.c.l.b16 %v121
  %v322 = vunpack.c.l.b16 %v122
  %v323 = vunpack.c.l.b16 %v123
  %v324 = vunpack.c.l.b16 %v124
  %v325 = vunpack.c.l.b16 %v125
  %v326 = vunpack.c.l.b16 %v126
  %v327 = vunpack.c.l.b16 %v127
  %v328 = vunpack.c.l.b16 %v128
  %v329 = vunpack.c.l.b16 %v129
  %v330 = vunpack.c.l.b16 %v130
  %v331 = vunpack.c.l.b16 %v131
  %v332 = vunpack.c.l.b16 %v132
  %v333 = vunpack.c.l.b16 %v133
  %v334 = vunpack.c.l.b16 %v134
  %v335 = vunpack.c.l.b16 %v135
  %v336 = vunpack.c.l.b16 %v136
  %v337 = vunpack.c.l.b16 %v137
  %v338 = vunpack.c.l.b16 %v138
  %v339 = vunpack.c.l.b16 %v139
  %v340 = vunpack.c.l.b16 %v140
  %v341 = vunpack.c.l.b16 %v141
  %v342 = vunpack.c.l.b16 %v142
  %v343 = vunpack.c.l.b16 %v143
  %v344 = vunpack.c.l.b16 %v144
  %v345 = vunpack.c.l.b16 %v145
  %v346 = vunpack.c.l.b16 %v146
  %v347 = vunpack.c.l.b16 %v147
  %v348 = vunpack.c.l.b16 %v148
  %v349 = vunpack.c.l.b16 %v149
  %v350 = vunpack.c.l.b16 %v150
  %v351 = vunpack.c.l.b16 %v151
  %v352 = vpack.c.b16 %v255, %v254
  %v353 = vpack.c.b16 %v257, %v256
  %v354 = vpack.c.b16 %v259, %v258
  %v355 = vpack.c.b16 %v261, %v260
  %v356 = vpack.c.b16 %v263, %v262
  %v357 = vpack.c.b16 %v265, %v264
  %v358 = vpack.c.b16 %v267, %v266
  %v359 = vpack.c.b16 %v269, %v268
  %v360 = vpack.c.b16 %v271, %v270
  %v361 = vpack.c.b16 %v273, %v272
  %v362 = vpack.c.b16 %v275, %v274
  %v363 = vpack.c.b16 %v277, %v276
  %v364 = vpack.c.b16 %v279, %v278
  %v365 = vpack.c.b16 %v281, %v280
  %v366 = vpack.c.b16 %v283, %v282
  %v367 = vpack.c.b16 %v285, %v284
  %v368 = vpack.c.b16 %v287, %v286
  %v369 = vpack.c.b16 %v289, %v288
  %v370 = vpack.c.b16 %v291, %v290
  %v371 = vpack.c.b16 %v293, %v292
  %v372 = vpack.c.b16 %v295, %v294
  %v373 = vpack.c.b16 %v297, %v296
  %v374 = vpack.c.b16 %v299, %v298
  %v375 = vpack.c.b16 %v301, %v300
  %v376 = vpack.c.b16 %v303, %v302
  %v377 = vpack.c.b16 %v305, %v304
  %v378 = vpack.c.b16 %v307, %v306
  %v379 = vpack.c.b16 %v309, %v308
  %v380 = vpack.c.b16 %v311, %v310
  %v381 = vpack.c.b16 %v313, %v312
  %v382 = vpack.c.b16 %v315, %v314
  %v383 = vpack.c.b16 %v317, %v316
  %v384 = vpack.c.b16 %v319, %v318
  %v385 = vpack.c.b16 %v321, %v320
  %v386 = vpack.c.b16 %v323, %v322
  %v387 = vpack.c.b16 %v325, %v324
  %v388 = vpack.c.b16 %v327, %v326
  %v389 = vpack.c.b16 %v329, %v328
  %v390 = vpack.c.b16 %v331, %v330
  %v391 = vpack.c.b16 %v333, %v332
  %v392 = vpack.c.b16 %v335, %v334
  %v393 = vpack.c.b16 %v337, %v336
  %v394 = vpack.c.b16 %v339, %v338
  %v395 = vpack.c.b16 %v341, %v340
  %v396 = vpack.c.b16 %v343, %v342
  %v397 = vpack.c.b16 %v345, %v344
  %v398 = vpack.c.b16 %v347, %v346
  %v399 = vpack.c.b16 %v349, %v348
  %v400 = vpack.c.b16 %v351, %v350
  %vm450 = vcmask 130048
  %v452 = vsel %vm450, %v53, 0
  %454 = vmatpush.bf16.msra.mxu0 %v359
  %455 = vmatpush.bf16.msra.mxu0 %v358
  %456 = vmatpush.bf16.msra.mxu0 %v357
  %457 = vmatpush.bf16.msra.mxu0 %v356
  %458 = vmatpush.bf16.msra.mxu0 %v355
  %459 = vmatpush.bf16.msra.mxu0 %v354
  %460 = vmatpush.bf16.msra.mxu0 %v353
  %461 = vmatpush.bf16.msra.mxu0 %v352
  %462 = vmatmul.bf16.gmra.mxu0 %v47
  %v463 = vpop.f32.mrf.mxu0
  %v464 = vadd.f32 %v154, %v463
  %v465 = vpop.f32.mrf.mxu0
  %v466 = vadd.f32 %v154, %v465
  %467 = vdwg.mxu0
  %468 = vmatpush.bf16.msra.mxu0 %v367
  %469 = vmatpush.bf16.msra.mxu0 %v366
  %470 = vmatpush.bf16.msra.mxu0 %v365
  %471 = vmatpush.bf16.msra.mxu0 %v364
  %472 = vmatpush.bf16.msra.mxu0 %v363
  %473 = vmatpush.bf16.msra.mxu0 %v362
  %474 = vmatpush.bf16.msra.mxu0 %v361
  %475 = vmatpush.bf16.msra.mxu0 %v360
  %476 = vmatmul.bf16.gmra.mxu0 %v48
  %v477 = vpop.f32.mrf.mxu0
  %v478 = vadd.f32 %v464, %v477
  %v479 = vpop.f32.mrf.mxu0
  %v480 = vadd.f32 %v466, %v479
  %481 = vdwg.mxu0
  %482 = vmatpush.bf16.msra.mxu0 %v375
  %483 = vmatpush.bf16.msra.mxu0 %v374
  %484 = vmatpush.bf16.msra.mxu0 %v373
  %485 = vmatpush.bf16.msra.mxu0 %v372
  %486 = vmatpush.bf16.msra.mxu0 %v371
  %487 = vmatpush.bf16.msra.mxu0 %v370
  %488 = vmatpush.bf16.msra.mxu0 %v369
  %489 = vmatpush.bf16.msra.mxu0 %v368
  %490 = vmatmul.bf16.gmra.mxu0 %v49
  %v491 = vpop.f32.mrf.mxu0
  %v492 = vadd.f32 %v478, %v491
  %v493 = vpop.f32.mrf.mxu0
  %v494 = vadd.f32 %v480, %v493
  %495 = vdwg.mxu0
  %496 = vmatpush.bf16.msra.mxu0 %v383
  %497 = vmatpush.bf16.msra.mxu0 %v382
  %498 = vmatpush.bf16.msra.mxu0 %v381
  %499 = vmatpush.bf16.msra.mxu0 %v380
  %500 = vmatpush.bf16.msra.mxu0 %v379
  %501 = vmatpush.bf16.msra.mxu0 %v378
  %502 = vmatpush.bf16.msra.mxu0 %v377
  %503 = vmatpush.bf16.msra.mxu0 %v376
  %504 = vmatmul.bf16.gmra.mxu0 %v50
  %v505 = vpop.f32.mrf.mxu0
  %v506 = vadd.f32 %v492, %v505
  %v507 = vpop.f32.mrf.mxu0
  %v508 = vadd.f32 %v494, %v507
  %509 = vdwg.mxu0
  %510 = vmatpush.bf16.msra.mxu0 %v391
  %511 = vmatpush.bf16.msra.mxu0 %v390
  %512 = vmatpush.bf16.msra.mxu0 %v389
  %513 = vmatpush.bf16.msra.mxu0 %v388
  %514 = vmatpush.bf16.msra.mxu0 %v387
  %515 = vmatpush.bf16.msra.mxu0 %v386
  %516 = vmatpush.bf16.msra.mxu0 %v385
  %517 = vmatpush.bf16.msra.mxu0 %v384
  %518 = vmatmul.bf16.gmra.mxu0 %v51
  %v519 = vpop.f32.mrf.mxu0
  %v520 = vadd.f32 %v506, %v519
  %v521 = vpop.f32.mrf.mxu0
  %v522 = vadd.f32 %v508, %v521
  %523 = vdwg.mxu0
  %524 = vmatpush.bf16.msra.mxu0 %v399
  %525 = vmatpush.bf16.msra.mxu0 %v398
  %526 = vmatpush.bf16.msra.mxu0 %v397
  %527 = vmatpush.bf16.msra.mxu0 %v396
  %528 = vmatpush.bf16.msra.mxu0 %v395
  %529 = vmatpush.bf16.msra.mxu0 %v394
  %530 = vmatpush.bf16.msra.mxu0 %v393
  %531 = vmatpush.bf16.msra.mxu0 %v392
  %532 = vmatmul.bf16.gmra.mxu0 %v52
  %v533 = vpop.f32.mrf.mxu0
  %v534 = vadd.f32 %v520, %v533
  %v535 = vpop.f32.mrf.mxu0
  %v536 = vadd.f32 %v522, %v535
  %537 = vdwg.mxu0
  %538 = vmatpush.bf16.msra.mxu0 0
  %539 = vmatpush.bf16.msra.mxu0 0
  %540 = vmatpush.bf16.msra.mxu0 0
  %541 = vmatpush.bf16.msra.mxu0 0
  %542 = vmatpush.bf16.msra.mxu0 0
  %543 = vmatpush.bf16.msra.mxu0 0
  %544 = vmatpush.bf16.msra.mxu0 0
  %545 = vmatpush.bf16.msra.mxu0 %v400
  %546 = vmatmul.bf16.gmra.mxu0 %v452
  %v547 = vpop.f32.mrf.mxu0
  %v548 = vadd.f32 %v534, %v547
  %v549 = vpop.f32.mrf.mxu0
  %v550 = vadd.f32 %v536, %v549
  %551 = vdwg.mxu0
  %v552 = vmax.f32 %v548, 0.0
  %v553 = vmax.f32 %v550, 0.0
  %v554 = vpack.c.bf16 %v553, %v552
  %v555 = vld [vmem:[%s3] sm:$0xf]
  %v556 = vld [vmem:[%s3 + $0x4] sm:$0xf]
  %v557 = vld [vmem:[%s3 + $0x8] sm:$0xf]
  %v558 = vld [vmem:[%s3 + $0xc] sm:$0xf]
  %v559 = vld [vmem:[%s3 + $0x10] sm:$0xf]
  %v560 = vld [vmem:[%s3 + $0x14] sm:$0xf]
  %v561 = vld [vmem:[%s3 + $0x18] sm:$0xf]
  %v562 = vld [vmem:[%s3 + $0x1c] sm:$0xf]
  %v563 = vld [vmem:[%s3 + $0x20] sm:$0xf]
  %v564 = vld [vmem:[%s3 + $0x24] sm:$0xf]
  %v565 = vld [vmem:[%s3 + $0x28] sm:$0xf]
  %v566 = vld [vmem:[%s3 + $0x2c] sm:$0xf]
  %v567 = vld [vmem:[%s3 + $0x30] sm:$0xf]
  %v568 = vld [vmem:[%s3 + $0x34] sm:$0xf]
  %v569 = vld [vmem:[%s3 + $0x38] sm:$0xf]
  %v570 = vld [vmem:[%s3 + $0x3c] sm:$0xf]
  %v571 = vld [vmem:[%s4] sm:$0x1]
  %v573 = vperm.slane %v571, 0
  %v591 = vunpack.c.l.b16 %v555
  %v592 = vunpack.c.l.b16 %v556
  %v593 = vunpack.c.l.b16 %v557
  %v594 = vunpack.c.l.b16 %v558
  %v595 = vunpack.c.l.b16 %v559
  %v596 = vunpack.c.l.b16 %v560
  %v597 = vunpack.c.l.b16 %v561
  %v598 = vunpack.c.l.b16 %v562
  %v599 = vunpack.c.l.b16 %v563
  %v600 = vunpack.c.l.b16 %v564
  %v601 = vunpack.c.l.b16 %v565
  %v602 = vunpack.c.l.b16 %v566
  %v603 = vunpack.c.l.b16 %v567
  %v604 = vunpack.c.l.b16 %v568
  %v605 = vunpack.c.l.b16 %v569
  %v606 = vunpack.c.l.b16 %v570
  %v607 = vpack.c.b16 %v592, %v591
  %v608 = vpack.c.b16 %v594, %v593
  %v609 = vpack.c.b16 %v596, %v595
  %v610 = vpack.c.b16 %v598, %v597
  %v611 = vpack.c.b16 %v600, %v599
  %v612 = vpack.c.b16 %v602, %v601
  %v613 = vpack.c.b16 %v604, %v603
  %v614 = vpack.c.b16 %v606, %v605
  %623 = vmatpush.bf16.msra.mxu0 %v614
  %624 = vmatpush.bf16.msra.mxu0 %v613
  %625 = vmatpush.bf16.msra.mxu0 %v612
  %626 = vmatpush.bf16.msra.mxu0 %v611
  %627 = vmatpush.bf16.msra.mxu0 %v610
  %628 = vmatpush.bf16.msra.mxu0 %v609
  %629 = vmatpush.bf16.msra.mxu0 %v608
  %630 = vmatpush.bf16.msra.mxu0 %v607
  %631 = vmatmul.bf16.gmra.mxu0 %v554
  %v632 = vpop.f32.mrf.mxu0
  %v633 = vadd.f32 %v573, %v632
  %v634 = vpop.f32.mrf.mxu0
  %v635 = vadd.f32 %v573, %v634
  %636 = vdwg.mxu0
  %v637 = vmax.f32 %v633, 0.0
  %v638 = vmax.f32 %v635, 0.0
  %v639 = vpack.c.bf16 %v638, %v637
  %v640 = vld [vmem:[%s5] sm:$0xf]
  %v641 = vld [vmem:[%s5 + $0x4] sm:$0xf]
  %v642 = vld [vmem:[%s5 + $0x8] sm:$0xf]
  %v643 = vld [vmem:[%s5 + $0xc] sm:$0xf]
  %v644 = vld [vmem:[%s5 + $0x10] sm:$0xf]
  %v645 = vld [vmem:[%s5 + $0x14] sm:$0xf]
  %v646 = vld [vmem:[%s5 + $0x18] sm:$0xf]
  %v647 = vld [vmem:[%s5 + $0x1c] sm:$0xf]
  %v648 = vld [vmem:[%s5 + $0x20] sm:$0xf]
  %v649 = vld [vmem:[%s5 + $0x24] sm:$0xf]
  %v650 = vld [vmem:[%s5 + $0x28] sm:$0xf]
  %v651 = vld [vmem:[%s5 + $0x2c] sm:$0xf]
  %v652 = vld [vmem:[%s5 + $0x30] sm:$0xf]
  %v653 = vld [vmem:[%s5 + $0x34] sm:$0xf]
  %v654 = vld [vmem:[%s5 + $0x38] sm:$0xf]
  %v655 = vld [vmem:[%s5 + $0x3c] sm:$0xf]
  %v656 = vld [vmem:[%s6] sm:$0x1]
  %v658 = vperm.slane %v656, 0
  %v676 = vunpack.c.l.b16 %v640
  %v677 = vunpack.c.l.b16 %v641
  %v678 = vunpack.c.l.b16 %v642
  %v679 = vunpack.c.l.b16 %v643
  %v680 = vunpack.c.l.b16 %v644
  %v681 = vunpack.c.l.b16 %v645
  %v682 = vunpack.c.l.b16 %v646
  %v683 = vunpack.c.l.b16 %v647
  %v684 = vunpack.c.l.b16 %v648
  %v685 = vunpack.c.l.b16 %v649
  %v686 = vunpack.c.l.b16 %v650
  %v687 = vunpack.c.l.b16 %v651
  %v688 = vunpack.c.l.b16 %v652
  %v689 = vunpack.c.l.b16 %v653
  %v690 = vunpack.c.l.b16 %v654
  %v691 = vunpack.c.l.b16 %v655
  %v692 = vpack.c.b16 %v677, %v676
  %v693 = vpack.c.b16 %v679, %v678
  %v694 = vpack.c.b16 %v681, %v680
  %v695 = vpack.c.b16 %v683, %v682
  %v696 = vpack.c.b16 %v685, %v684
  %v697 = vpack.c.b16 %v687, %v686
  %v698 = vpack.c.b16 %v689, %v688
  %v699 = vpack.c.b16 %v691, %v690
  %708 = vmatpush.bf16.msra.mxu0 %v699
  %709 = vmatpush.bf16.msra.mxu0 %v698
  %710 = vmatpush.bf16.msra.mxu0 %v697
  %711 = vmatpush.bf16.msra.mxu0 %v696
  %712 = vmatpush.bf16.msra.mxu0 %v695
  %713 = vmatpush.bf16.msra.mxu0 %v694
  %714 = vmatpush.bf16.msra.mxu0 %v693
  %715 = vmatpush.bf16.msra.mxu0 %v692
  %716 = vmatmul.bf16.gmra.mxu0 %v639
  %v717 = vpop.f32.mrf.mxu0
  %v718 = vadd.f32 %v658, %v717
  %v719 = vpop.f32.mrf.mxu0
  %v720 = vadd.f32 %v658, %v719
  %721 = vdwg.mxu0
  %v722 = vmax.f32 %v718, 0.0
  %v723 = vmax.f32 %v720, 0.0
  %v724 = vpack.c.bf16 %v723, %v722
  %v725 = vld [vmem:[%s7] sm:$0xf]
  %v726 = vld [vmem:[%s7 + $0x4] sm:$0xf]
  %v727 = vld [vmem:[%s7 + $0x8] sm:$0xf]
  %v728 = vld [vmem:[%s7 + $0xc] sm:$0xf]
  %v729 = vld [vmem:[%s7 + $0x10] sm:$0xf]
  %v730 = vld [vmem:[%s7 + $0x14] sm:$0xf]
  %v731 = vld [vmem:[%s7 + $0x18] sm:$0xf]
  %v732 = vld [vmem:[%s7 + $0x1c] sm:$0xf]
  %v733 = vld [vmem:[%s7 + $0x20] sm:$0xf]
  %v734 = vld [vmem:[%s7 + $0x24] sm:$0xf]
  %v735 = vld [vmem:[%s7 + $0x28] sm:$0xf]
  %v736 = vld [vmem:[%s7 + $0x2c] sm:$0xf]
  %v737 = vld [vmem:[%s7 + $0x30] sm:$0xf]
  %v738 = vld [vmem:[%s7 + $0x34] sm:$0xf]
  %v739 = vld [vmem:[%s7 + $0x38] sm:$0xf]
  %v740 = vld [vmem:[%s7 + $0x3c] sm:$0xf]
  %v741 = vld [vmem:[%s8] sm:$0x1]
  %v743 = vperm.slane %v741, 0
  %v761 = vunpack.c.l.b16 %v725
  %v762 = vunpack.c.l.b16 %v726
  %v763 = vunpack.c.l.b16 %v727
  %v764 = vunpack.c.l.b16 %v728
  %v765 = vunpack.c.l.b16 %v729
  %v766 = vunpack.c.l.b16 %v730
  %v767 = vunpack.c.l.b16 %v731
  %v768 = vunpack.c.l.b16 %v732
  %v769 = vunpack.c.l.b16 %v733
  %v770 = vunpack.c.l.b16 %v734
  %v771 = vunpack.c.l.b16 %v735
  %v772 = vunpack.c.l.b16 %v736
  %v773 = vunpack.c.l.b16 %v737
  %v774 = vunpack.c.l.b16 %v738
  %v775 = vunpack.c.l.b16 %v739
  %v776 = vunpack.c.l.b16 %v740
  %v777 = vpack.c.b16 %v762, %v761
  %v778 = vpack.c.b16 %v764, %v763
  %v779 = vpack.c.b16 %v766, %v765
  %v780 = vpack.c.b16 %v768, %v767
  %v781 = vpack.c.b16 %v770, %v769
  %v782 = vpack.c.b16 %v772, %v771
  %v783 = vpack.c.b16 %v774, %v773
  %v784 = vpack.c.b16 %v776, %v775
  %793 = vmatpush.bf16.msra.mxu0 %v784
  %794 = vmatpush.bf16.msra.mxu0 %v783
  %795 = vmatpush.bf16.msra.mxu0 %v782
  %796 = vmatpush.bf16.msra.mxu0 %v781
  %797 = vmatpush.bf16.msra.mxu0 %v780
  %798 = vmatpush.bf16.msra.mxu0 %v779
  %799 = vmatpush.bf16.msra.mxu0 %v778
  %800 = vmatpush.bf16.msra.mxu0 %v777
  %801 = vmatmul.bf16.gmra.mxu0 %v724
  %v802 = vpop.f32.mrf.mxu0
  %v803 = vadd.f32 %v743, %v802
  %v804 = vpop.f32.mrf.mxu0
  %v805 = vadd.f32 %v743, %v804
  %806 = vdwg.mxu0
  %807 = vmax.xlane.f32.xlu0 %v803
  %v808 = vpop.xlane.xlu0 %807
  %809 = vmax.xlane.f32.xlu0 %v805
  %v810 = vpop.xlane.xlu0 %809
  %v811 = vsub.f32 %v803, %v808
  %v812 = vsub.f32 %v805, %v810
  %v813 = vmul.f32 %v811, 1.442695
  %v814 = vpow.pop %v813
  %v815 = vmul.f32 %v812, 1.442695
  %v816 = vpow.pop %v815
  %817 = vadd.xlane.f32.xlu0 %v814
  %v818 = vpop.xlane.xlu0 %817
  %819 = vadd.xlane.f32.xlu0 %v816
  %v820 = vpop.xlane.xlu0 %819
  %v821 = vlog2.pop %v818
  %v822 = vmul.f32 %v821, 0.6931472
  %v823 = vlog2.pop %v820
  %v824 = vmul.f32 %v823, 0.6931472
  %v825 = vsub.f32 %v811, %v822
  %v826 = vsub.f32 %v812, %v824
  %827 = vst [vmem:[%s9] sm:$0xff] %v825
  %828 = vst [vmem:[%s9 + $0x8] sm:$0xff] %v826
  // Predicated region
  $region38: #{mlp_forward.1} parent=0 // pred_check
    _
  $region39: #{mlp_forward.1} parent=0 // pred_check_branch
    %830 = sbr.rel (0) target = $region41
  $region40: #{mlp_forward.1} parent=0 // pred_region
    _
  $region41: #{mlp_forward.1} parent=0 // pred_fallthru
    _
  // Predicated region
  $region42: #{mlp_forward.1} parent=0 // pred_check
    _
  $region43: #{mlp_forward.1} parent=0 // pred_check_branch
    %832 = sbr.rel (0) target = $region45
  $region44: #{mlp_forward.1} parent=0 // pred_region
    _
  $region45: #{mlp_forward.1} parent=0 // pred_fallthru
    _

</llo_original>
